<compile_context>
chip_gen: v5e
topology: v5e:2x2
jax: 0.10.0
libtpu: 0.0.40
codegen_flags: <defaults>
</compile_context>

<pallas_src>
import math
import functools

import jax
import jax.numpy as jnp
from jax.experimental import pallas as pl
from jax.experimental.pallas import tpu as pltpu

_LANE = 128          # lane width of a vreg
_MAX_TILE_ROWS = 512  # 512 x 128 x 4B = 256 KiB per f32 buffer (double-buffered)


def _drop_path_kernel(mask_ref, x_ref, o_ref):
    # mask_ref: (1, 1, 1) per-sample scale (0 or 1/keep_prob), already in x.dtype.
    # x_ref / o_ref: (1, tile_rows, 128) lane/sublane-dense tile of one sample.
    o_ref[...] = x_ref[...] * mask_ref[0, 0, 0]


def drop_path_pallas(x, *, seed=0, drop_prob=0.0, training=False,
                     scale_by_keep=True):
    """Pallas DropPath. `x` has shape (B, ...). Matches torch drop_path()."""
    if drop_prob == 0.0 or not training:
        return x

    keep_prob = 1.0 - float(drop_prob)
    B = x.shape[0]
    M = int(math.prod(x.shape[1:]))

    # Per-sample Bernoulli(keep_prob) mask, pre-scaled, in the native dtype.
    key = jax.random.PRNGKey(seed)
    keep = jax.random.bernoulli(key, p=keep_prob, shape=(B,))
    scale = (1.0 / keep_prob) if (scale_by_keep and keep_prob > 0.0) else 1.0
    mask = jnp.where(keep, scale, 0.0).astype(x.dtype).reshape(B, 1, 1)

    # Lane/sublane-dense layout: each sample becomes (rows, 128), padded so the
    # row count is a multiple of the row tile (tile rows are a multiple of 8).
    rows = -(-M // _LANE)
    tile_rows = min(_MAX_TILE_ROWS, ((rows + 7) // 8) * 8)
    rows_pad = -(-rows // tile_rows) * tile_rows
    m_pad = rows_pad * _LANE

    x_flat = x.reshape(B, M)
    if m_pad != M:
        x_flat = jnp.pad(x_flat, ((0, 0), (0, m_pad - M)))
    x3 = x_flat.reshape(B, rows_pad, _LANE)

    grid = (B, rows_pad // tile_rows)

    out = pl.pallas_call(
        _drop_path_kernel,
        out_shape=jax.ShapeDtypeStruct((B, rows_pad, _LANE), x.dtype),
        grid=grid,
        in_specs=[
            pl.BlockSpec((1, 1, 1), lambda b, r: (b, 0, 0)),            # mask
            pl.BlockSpec((1, tile_rows, _LANE), lambda b, r: (b, r, 0)),  # x
        ],
        out_specs=pl.BlockSpec((1, tile_rows, _LANE), lambda b, r: (b, r, 0)),
        compiler_params=pltpu.CompilerParams(
            dimension_semantics=("parallel", "parallel"),
        ),
    )(mask, x3)

    out = out.reshape(B, m_pad)[:, :M].reshape(x.shape)
    return out


if __name__ == "__main__":
    key = jax.random.PRNGKey(0)
    B, N, D = 2, 8, 32
    x = jax.random.normal(key, (B, N, D), dtype=jnp.float32)

    drop_prob = 0.5
    keep_prob = 1.0 - drop_prob

    # Training mode: per-sample stochastic depth.
    y = drop_path_pallas(x, seed=123, drop_prob=drop_prob, training=True,
                         scale_by_keep=True)
    y = jax.block_until_ready(y)

    # Sanity: each sample is either entirely zero or x / keep_prob.
    ok = True
    for b in range(B):
        zeroed = bool(jnp.allclose(y[b], 0.0))
        scaled = bool(jnp.allclose(y[b], x[b] / keep_prob, atol=1e-5))
        ok = ok and (zeroed or scaled)

    # Eval mode (or drop_prob=0): identity.
    y_eval = drop_path_pallas(x, seed=123, drop_prob=drop_prob, training=False)
    y_eval = jax.block_until_ready(y_eval)
    ok = ok and bool(jnp.array_equal(y_eval, x))

    # bf16 path: multiply happens in native dtype (no f32 upcast of the tile).
    xb = x.astype(jnp.bfloat16)
    yb = jax.block_until_ready(
        drop_path_pallas(xb, seed=7, drop_prob=drop_prob, training=True))
    ok = ok and (yb.shape == xb.shape) and (yb.dtype == xb.dtype)
    for b in range(B):
        zeroed = bool(jnp.allclose(yb[b].astype(jnp.float32), 0.0))
        scaled = bool(jnp.allclose(yb[b].astype(jnp.float32),
                                   (xb[b].astype(jnp.float32)) / keep_prob,
                                   atol=2e-2))
        ok = ok and (zeroed or scaled)

    if ok:
        print("KERNEL_OK")
    else:
        raise SystemExit("drop_path output failed sanity check")
</pallas_src>

<mosaic_0001>
module attributes {stable_mosaic.version = 11 : i64} {
  func.func @_drop_path_kernel(%arg0: i32, %arg1: i32, %arg2: memref<1x1x1xf32, #tpu.memory_space<vmem>>, %arg3: memref<1x8x128xf32, #tpu.memory_space<vmem>>, %arg4: memref<1x8x128xf32, #tpu.memory_space<vmem>>) attributes {dimension_semantics = [#tpu.dimension_semantics<parallel>, #tpu.dimension_semantics<parallel>], iteration_bounds = array<i64: 2, 1>, scalar_prefetch = 0 : i64, scratch_operands = 0 : i64, tpu.core_type = #tpu.core_type<tc>, window_params = [{transform_indices = @transform_0, window_bounds = array<i64: 1, 1, 1>}, {transform_indices = @transform_1, window_bounds = array<i64: 1, 8, 128>}, {transform_indices = @transform_2, window_bounds = array<i64: 1, 8, 128>}]} {
    %c0 = arith.constant 0 : index
    %c0_0 = arith.constant 0 : index
    %c0_1 = arith.constant 0 : index
    %0 = vector.load %arg3[%c0, %c0_0, %c0_1] : memref<1x8x128xf32, #tpu.memory_space<vmem>>, vector<1x8x128xf32>
    %c0_2 = arith.constant 0 : index
    %c0_3 = arith.constant 0 : index
    %c0_4 = arith.constant 0 : index
    %1 = vector.load %arg2[%c0_2, %c0_3, %c0_4] : memref<1x1x1xf32, #tpu.memory_space<vmem>>, vector<1x1x1xf32>
    %2 = vector.extract %1[0, 0, 0] : f32 from vector<1x1x1xf32>
    %3 = vector.broadcast %2 : f32 to vector<1x8x128xf32>
    %4 = arith.mulf %0, %3 : vector<1x8x128xf32>
    %c0_5 = arith.constant 0 : index
    %c0_6 = arith.constant 0 : index
    %c0_7 = arith.constant 0 : index
    %5 = vector.load %arg4[%c0_5, %c0_6, %c0_7] : memref<1x8x128xf32, #tpu.memory_space<vmem>>, vector<1x8x128xf32>
    tpu.vector_store %arg4[%c0_5, %c0_6, %c0_7], %4 {strides = array<i32>} : memref<1x8x128xf32, #tpu.memory_space<vmem>>, vector<1x8x128xf32>,
    return
  }
  func.func @transform_0(%arg0: i32, %arg1: i32) -> (i32, i32, i32) {
    %c0_i32 = arith.constant 0 : i32
    %c0_i32_0 = arith.constant 0 : i32
    %c0_i32_1 = arith.constant 0 : i32
    return %arg0, %c0_i32, %c0_i32_0 : i32, i32, i32
  }
  func.func @transform_1(%arg0: i32, %arg1: i32) -> (i32, i32, i32) {
    %c0_i32 = arith.constant 0 : i32
    %c0_i32_0 = arith.constant 0 : i32
    return %arg0, %arg1, %c0_i32 : i32, i32, i32
  }
  func.func @transform_2(%arg0: i32, %arg1: i32) -> (i32, i32, i32) {
    %c0_i32 = arith.constant 0 : i32
    %c0_i32_0 = arith.constant 0 : i32
    return %arg0, %arg1, %c0_i32 : i32, i32, i32
  }
}

</mosaic_0001>

<llo_original>
// kernel: tpu_custom_call.1
$region0: #{tpu_custom_call.1}
  #allocation0 [shape = 'u32[]', space=smem, size = 0x4, offset = 0x4, fixed_abs, tag = 'smem constant byte address 0x4 - core index']
  #allocation1 [shape = 'u32[72,128]{1,0:T(1,128)}', space=vmem, size = 0x9000, scoped, tag = 'internal scratch']
  %s0 = inlined_call_operand.vmem [shape: f32[2,1,1], index: 0, kind: input, shape index: {}]
  %s1 = inlined_call_operand.hbm [shape: f32[2,8,128], index: 1, kind: input, shape index: {}]
  %s2 = inlined_call_operand.hbm [shape: f32[2,8,128], index: 2, kind: output, shape index: {}]
  %s3 = sld [smem:[#allocation0]]
  $region45: #{tpu_custom_call.1} parent=0
    _
  %s5 = ssub.s32 1, %s3
  %s6 = scalar_select 0, %s5, %s3
  $region1: #{tpu_custom_call.1} parent=0
    #allocation2 [shape = 'u8[8192]{0}', space=vmem, size = 0x2000, scoped, tag = 'input window, operand 1']
    #allocation3 [shape = 's32[2]{0}', space=sflag, size = 0x8, scoped, tag = 'scoped memory for tpu_custom_call.1']
    #allocation4 [shape = 's32[2]{0}', space=sflag, size = 0x8, scoped, tag = 'scoped memory for tpu_custom_call.1']
    #allocation5 [shape = 'u8[8192]{0}', space=vmem, size = 0x2000, scoped, tag = 'output window, operand 0']
    %7 = vsyncpa [#allocation3], 0
    %s8 = scalar_lea.sflag [#allocation3], 1
    %9 = vsyncpa %s8, 0
    %10 = vsyncpa [#allocation4], 0
    %s11 = scalar_lea.sflag [#allocation4], 1
    %12 = vsyncpa %s11, 0
    loop: start=0, step=1, limit=4
    $region2: #{tpu_custom_call.1} parent=1 // loop_pre_header
      _
    $region3: #{tpu_custom_call.1} parent=1 // loop_header
      %s14 = sphi 0, %s18
      %p15 = scmp.ge.s32.totalorder %s14, 4
      %s21 = sphi 0, %s33
      %s22 = sphi 0, %s29
      %s23 = sphi 0, %s21
      %s24 = sphi 0, %s22
      %s25 = sphi 0, %s23
      %s26 = sphi 0, %s24
      %s36 = sphi 0, %s38
      %s39 = sphi 0, %s36
      %s40 = sphi 0, %s39
      %s56 = sphi 0, %s40
      %s64 = sphi 0, %s66
      %s67 = sphi 0, %s64
      %s68 = sphi 0, %s67
      %s84 = sphi 0, %s68
      %s92 = sphi 0, %s94
      %s95 = sphi 0, %s92
      %s96 = sphi 0, %s95
      %s112 = sphi 0, %s96
    $region4: #{tpu_custom_call.1} parent=1 // loop_header_branch
      %17 = sbr.rel (%p15) target = $region8
    $region5: #{tpu_custom_call.1} parent=1 // loop_body
      %s19 = ssub.s32 %s14, 1
      %s20 = ssub.s32 %s14, 2
      %s27 = sadd.s32 1, %s22
      %p28 = scmp.ge.s32.totalorder %s27, 1
      %s29 = scalar_select %p28, 0, %s27
      %s30 = sadd.s32 1, %s21
      %s31 = scalar_select %p28, %s30, %s21
      %p32 = scmp.ge.s32.totalorder %s31, 2
      %s33 = scalar_select %p32, 0, %s31
      %s34 = ssub.s32 %s21, %s33
      %p35 = scmp.eq.s32.totalorder %s34, 0
      %s37 = sadd.s32 %s36, 1
      %s38 = scalar_select %p35, %s36, %s37
      %p41 = pneg %p35
      %p42 = scmp.eq.s32.totalorder %s14, 1
      %p43 = por %p41, %p42
      %p44 = scmp.ne.s32.totalorder %s36, %s39
      %p45 = scmp.eq.s32.totalorder %s14, 0
      %p46 = por %p44, %p45
      %p47 = scmp.ne.s32.totalorder %s36, %s39
      %p48 = scmp.eq.s32.totalorder %s19, 1
      %p49 = por %p47, %p48
      %p50 = scmp.ne.s32.totalorder %s39, %s40
      %p51 = scmp.eq.s32.totalorder %s19, 0
      %p52 = por %p50, %p51
      %p53 = scmp.ne.s32.totalorder %s39, %s40
      %p54 = scmp.eq.s32.totalorder %s20, 1
      %p55 = por %p53, %p54
      %p57 = scmp.ne.s32.totalorder %s40, %s56
      %p58 = scmp.eq.s32.totalorder %s20, 0
      %p59 = por %p57, %p58
      %s60 = ssub.s32 %s21, %s33
      %s61 = ssub.s32 %s22, %s29
      %s62 = sor.u32 %s60, %s61
      %p63 = scmp.eq.s32.totalorder %s62, 0
      %s65 = sadd.s32 %s64, 1
      %s66 = scalar_select %p63, %s64, %s65
      %p69 = pneg %p63
      %p70 = scmp.eq.s32.totalorder %s14, 1
      %p71 = por %p69, %p70
      %p72 = scmp.ne.s32.totalorder %s64, %s67
      %p73 = scmp.eq.s32.totalorder %s14, 0
      %p74 = por %p72, %p73
      %p75 = scmp.ne.s32.totalorder %s64, %s67
      %p76 = scmp.eq.s32.totalorder %s19, 1
      %p77 = por %p75, %p76
      %p78 = scmp.ne.s32.totalorder %s67, %s68
      %p79 = scmp.eq.s32.totalorder %s19, 0
      %p80 = por %p78, %p79
      %p81 = scmp.ne.s32.totalorder %s67, %s68
      %p82 = scmp.eq.s32.totalorder %s20, 1
      %p83 = por %p81, %p82
      %p85 = scmp.ne.s32.totalorder %s68, %s84
      %p86 = scmp.eq.s32.totalorder %s20, 0
      %p87 = por %p85, %p86
      %s88 = ssub.s32 %s21, %s33
      %s89 = ssub.s32 %s22, %s29
      %s90 = sor.u32 %s88, %s89
      %p91 = scmp.eq.s32.totalorder %s90, 0
      %s93 = sadd.s32 %s92, 1
      %s94 = scalar_select %p91, %s92, %s93
      %p97 = pneg %p91
      %p98 = scmp.eq.s32.totalorder %s14, 1
      %p99 = por %p97, %p98
      %p100 = scmp.ne.s32.totalorder %s92, %s95
      %p101 = scmp.eq.s32.totalorder %s14, 0
      %p102 = por %p100, %p101
      %p103 = scmp.ne.s32.totalorder %s92, %s95
      %p104 = scmp.eq.s32.totalorder %s19, 1
      %p105 = por %p103, %p104
      %p106 = scmp.ne.s32.totalorder %s95, %s96
      %p107 = scmp.eq.s32.totalorder %s19, 0
      %p108 = por %p106, %p107
      %p109 = scmp.ne.s32.totalorder %s95, %s96
      %p110 = scmp.eq.s32.totalorder %s20, 1
      %p111 = por %p109, %p110
      %p113 = scmp.ne.s32.totalorder %s96, %s112
      %p114 = scmp.eq.s32.totalorder %s20, 0
      %p115 = por %p113, %p114
      %p116 = scmp.le.s32.totalorder 1, %s14
      %p117 = scmp.lt.s32.totalorder %s14, 3
      %p118 = pnand %p116, %p117
      %p119 = pneg %p118
      // Predicated region
      $region9: #{tpu_custom_call.1} parent=5 // pred_check
        _
      $region10: #{tpu_custom_call.1} parent=5 // pred_check_branch
        %121 = sbr.rel (%p118) target = $region12
      $region11: #{tpu_custom_call.1} parent=5 // pred_region
        %s122 = ssub.s32 %s14, 1
      $region12: #{tpu_custom_call.1} parent=5 // pred_fallthru
        _
      %p123 = scmp.lt.s32.totalorder %s14, 2
      // Predicated region
      $region13: #{tpu_custom_call.1} parent=5 // pred_check
        %p124 = pneg %p123
      $region14: #{tpu_custom_call.1} parent=5 // pred_check_branch
        %126 = sbr.rel (%p124) target = $region16
      $region15: #{tpu_custom_call.1} parent=5 // pred_region
        // Predicated region
        $region17: #{tpu_custom_call.1} parent=15 // pred_check
          %p127 = pneg %p46
        $region18: #{tpu_custom_call.1} parent=15 // pred_check_branch
          %129 = sbr.rel (%p127) target = $region20
        $region19: #{tpu_custom_call.1} parent=15 // pred_region
          %p130 = scmp.lt.s32.totalorder %s21, 1
          %s131 = scalar_select %p130, %s21, 1
          %s132 = scalar_lea.vmem %s0, %s131
        $region20: #{tpu_custom_call.1} parent=15 // pred_fallthru
          _
        // Predicated region
        $region21: #{tpu_custom_call.1} parent=15 // pred_check
          %p133 = pneg %p74
        $region22: #{tpu_custom_call.1} parent=15 // pred_check_branch
          %135 = sbr.rel (%p133) target = $region24
        $region23: #{tpu_custom_call.1} parent=15 // pred_region
          %s136 = sand.u32 %s64, 1
          %s137 = scalar_lea.sflag [#allocation3], %s136
          %s138 = sand.u32 %s64, 1
          %s139 = smul.addr %s138, 8
          %s140 = scalar_lea.vmem [#allocation2], %s139
          %142 = vsyncadd %s137, 0
          %s143 = sadd.s32 %s22, %s21
          %s144 = smul.addr %s143, 8
          %s145 = scalar_lea.hbm %s1, %s144
          %s147 = sshll.u32 %s145, 4
          %s148 = int_to_ptr.hbm [resolvable:$true] %s147
          %s149 = sshll.u32 %s140, 4
          %s150 = int_to_ptr.vmem [resolvable:$true] %s149
          %152 = dma.hbm_to_vmem [thread:$0]  %s148, 128, %s150, %s137
        $region24: #{tpu_custom_call.1} parent=15 // pred_fallthru
          _
      $region16: #{tpu_custom_call.1} parent=5 // pred_fallthru
        _
      %p153 = scmp.le.s32.totalorder 1, %s14
      %p154 = scmp.lt.s32.totalorder %s14, 3
      %p155 = pnand %p153, %p154
      %p156 = pneg %p155
      // Predicated region
      $region25: #{tpu_custom_call.1} parent=5 // pred_check
        _
      $region26: #{tpu_custom_call.1} parent=5 // pred_check_branch
        %158 = sbr.rel (%p155) target = $region28
      $region27: #{tpu_custom_call.1} parent=5 // pred_region
        %s159 = ssub.s32 %s14, 1
        %s160 = sand.u32 %s67, 1
        %s161 = scalar_lea.sflag [#allocation3], %s160
        %s162 = sand.u32 %s67, 1
        %s163 = smul.addr %s162, 8
        %s164 = scalar_lea.vmem [#allocation2], %s163
        // Predicated region
        $region29: #{tpu_custom_call.1} parent=27 // pred_check
          %p165 = pneg %p80
        $region30: #{tpu_custom_call.1} parent=27 // pred_check_branch
          %167 = sbr.rel (%p165) target = $region32
        $region31: #{tpu_custom_call.1} parent=27 // pred_region
          %169 = dma.done %s161, 128
        $region32: #{tpu_custom_call.1} parent=27 // pred_fallthru
          _
        %p170 = scmp.lt.s32.totalorder %s23, 1
        %s171 = scalar_select %p170, %s23, 1
        %s172 = scalar_lea.vmem %s0, %s171
        %p173 = pneg %p52
        %p174 = pneg %p49
        %s175 = sand.u32 %s67, 1
        %s176 = scalar_lea.sflag [#allocation3], %s175
        %s177 = sand.u32 %s67, 1
        %s178 = smul.addr %s177, 8
        %s179 = scalar_lea.vmem [#allocation2], %s178
        %p180 = pneg %p80
        %p181 = pneg %p77
        %p182 = pneg %p108
        %p183 = pneg %p105
        %s184 = sand.u32 %s95, 1
        %s185 = scalar_lea.sflag [#allocation4], %s184
        %s186 = sand.u32 %s95, 1
        %s187 = smul.addr %s186, 8
        %s188 = scalar_lea.vmem [#allocation5], %s187
        %p189 = scmp.lt.s32.totalorder %s23, 1
        %s190 = scalar_select %p189, %s23, 1
        %s191 = scalar_lea.vmem %s0, %s190
        %v192 = vld [vmem:[%s164] sm:$0xff]
        %v193 = vld [vmem:[%s191] sm:$0x1]
        %s194 = vtos %v193
        %v195 = vstv %s194
        %v196 = vmul.f32 %v192, %v195
        %197 = vst [vmem:[%s188] sm:$0xff] %v196
        %s198 = sand.u32 %s95, 1
        %s199 = scalar_lea.sflag [#allocation4], %s198
        %s200 = sand.u32 %s95, 1
        %s201 = smul.addr %s200, 8
        %s202 = scalar_lea.vmem [#allocation5], %s201
        // Predicated region
        $region33: #{tpu_custom_call.1} parent=27 // pred_check
          %p203 = pneg %p105
        $region34: #{tpu_custom_call.1} parent=27 // pred_check_branch
          %205 = sbr.rel (%p203) target = $region36
        $region35: #{tpu_custom_call.1} parent=27 // pred_region
          %207 = vsyncadd %s199, 0
          %s208 = sadd.s32 %s24, %s23
          %s209 = smul.addr %s208, 8
          %s210 = scalar_lea.hbm %s2, %s209
          %s212 = sshll.u32 %s202, 4
          %s213 = int_to_ptr.vmem [resolvable:$true] %s212
          %s214 = sshll.u32 %s210, 4
          %s215 = int_to_ptr.hbm [resolvable:$true] %s214
          %217 = dma.vmem_to_hbm [thread:$0]  %s213, 128, %s215, %s199
        $region36: #{tpu_custom_call.1} parent=27 // pred_fallthru
          _
      $region28: #{tpu_custom_call.1} parent=5 // pred_fallthru
        _
      %p218 = scmp.le.s32.totalorder 2, %s14
      // Predicated region
      $region37: #{tpu_custom_call.1} parent=5 // pred_check
        %p219 = pneg %p218
      $region38: #{tpu_custom_call.1} parent=5 // pred_check_branch
        %221 = sbr.rel (%p219) target = $region40
      $region39: #{tpu_custom_call.1} parent=5 // pred_region
        %s222 = ssub.s32 %s14, 2
        // Predicated region
        $region41: #{tpu_custom_call.1} parent=39 // pred_check
          %p223 = pneg %p111
        $region42: #{tpu_custom_call.1} parent=39 // pred_check_branch
          %225 = sbr.rel (%p223) target = $region44
        $region43: #{tpu_custom_call.1} parent=39 // pred_region
          %s226 = sand.u32 %s96, 1
          %s227 = scalar_lea.sflag [#allocation4], %s226
          %s228 = sand.u32 %s96, 1
          %s229 = smul.addr %s228, 8
          %s230 = scalar_lea.vmem [#allocation5], %s229
          %232 = dma.done %s227, 128
        $region44: #{tpu_custom_call.1} parent=39 // pred_fallthru
          _
      $region40: #{tpu_custom_call.1} parent=5 // pred_fallthru
        _
    $region6: #{tpu_custom_call.1} parent=1 // loop_footer
      %s18 = sadd.s32 1, %s14
    $region7: #{tpu_custom_call.1} parent=1 // loop_footer_branch
      %13 = sbr.rel target = $region3
    $region8: #{tpu_custom_call.1} parent=1 // loop_exit
      _
    %233 = vsyncpa [#allocation3], 1
    %s234 = scalar_lea.sflag [#allocation3], 1
    %235 = vsyncpa %s234, 1
    %236 = vsyncpa [#allocation4], 1
    %s237 = scalar_lea.sflag [#allocation4], 1
    %238 = vsyncpa %s237, 1

</llo_original>
